<compile_context>
chip_gen: v7x
topology: tpu7x:2x2x1
jax: 0.10.0
libtpu: 0.0.40
codegen_flags: <defaults>
</compile_context>

<pallas_src>
import functools

import jax
import jax.numpy as jnp
from jax import lax
from jax.experimental import pallas as pl
from jax.experimental.pallas import tpu as pltpu


def _round_up(x: int, m: int) -> int:
    return ((x + m - 1) // m) * m


def _pick_tile_n(n: int, c: int, itemsize: int) -> int:
    """Rows per tile: ~4 MiB f32 working set, >=2 tiles when possible (v7x 2 TCs)."""
    sub = 16 if itemsize < 4 else 8          # bf16 packs 16 sublanes / vreg
    row_bytes_f32 = max(1, c * 4)            # budget against the f32 cast working set
    budget = 4 << 20                         # ~4 MiB logits tile: safe on v7x 64 MiB VMEM
    tile_n = (budget // row_bytes_f32) // sub * sub
    tile_n = max(sub, min(tile_n, 4096))
    tile_n = min(tile_n, _round_up(n, sub))  # never wildly larger than N

    num_tiles = pl.cdiv(n, tile_n)
    if num_tiles == 1:
        if n > 2 * sub:                      # split so both v7x TensorCores get work
            tile_n = max(sub, _round_up(pl.cdiv(n, 2), sub))
    elif num_tiles % 2:                      # best-effort even tile count for v7x
        cand = max(sub, _round_up(pl.cdiv(n, num_tiles + 1), sub))
        if pl.cdiv(n, cand) % 2 == 0:
            tile_n = cand
    return tile_n


def _focal_modulator(q, gamma: float):
    """(1 - pt)^gamma with integer-gamma specialization (VPU-only, no float pow)."""
    g = float(gamma)
    if g == int(g) and 0 <= int(g) <= 8:
        mod = jnp.ones_like(q)
        for _ in range(int(g)):
            mod = mod * q
        return mod
    return q ** g  # TODO(synk): non-integer gamma still goes through exp/log on the EUP.


def _focal_loss_kernel(logits_ref, targets_ref, out_ref, *,
                       alpha, gamma, n_valid, tile_n):
    i = pl.program_id(0)

    x = logits_ref[...].astype(jnp.float32)              # (TILE_N, C)
    t = targets_ref[...]                                  # (TILE_N, 1) int32

    # Numerically stable log-softmax denominator: per-row logsumexp over lanes.
    m = jnp.max(x, axis=-1, keepdims=True)                # (TILE_N, 1)
    lse = jnp.log(jnp.sum(jnp.exp(x - m), axis=-1, keepdims=True)) + m
    # TODO(synk): if a v7x bundle dump shows the XLU/EUP slot binding (HBM no longer
    # the limiter at 3.2 TB/s), offload this sum(exp) lane-reduction to the idle MXU
    # via jnp.dot(exp_x, ones((C, 128))) and read lane 0.

    # Gather the target-class logit via a one-hot compare (no dynamic gather on TPU).
    col = lax.broadcasted_iota(jnp.int32, x.shape, 1)     # (TILE_N, C)
    tgt_logit = jnp.sum(jnp.where(col == t, x, 0.0), axis=-1, keepdims=True)

    ce = lse - tgt_logit                                   # per-sample CE, (TILE_N, 1)
    pt = jnp.exp(-ce)
    q = jnp.maximum(1.0 - pt, 0.0)                         # clamp: pt can round > 1
    # TODO(synk): q = -expm1(-ce) would drop the clamp and gain precision for tiny ce,
    # but expm1 lowering coverage in Mosaic is not guaranteed; kept the proven path.
    focal = alpha * _focal_modulator(q, gamma) * ce        # (TILE_N, 1)

    def write(v):
        out_ref[...] = jnp.broadcast_to(jnp.sum(v), out_ref.shape).astype(jnp.float32)

    ragged = (n_valid % tile_n) != 0
    last = pl.num_programs(0) - 1

    if ragged:
        @pl.when(i == last)
        def _():
            # Last block reads past N: stale rows may hold NaN/Inf. Use a *select*
            # (not a multiply) so garbage cannot propagate into the partial sum.
            row = i * tile_n + lax.broadcasted_iota(jnp.int32, focal.shape, 0)
            write(jnp.where(row < n_valid, focal, 0.0))

        @pl.when(i != last)
        def _():
            write(focal)
    else:
        write(focal)


def focal_loss(logits: jax.Array, targets: jax.Array,
               alpha: float = 1.0, gamma: float = 2.0) -> jax.Array:
    """logits: (N, C) float, targets: (N,) int -> scalar f32 focal loss (mean)."""
    n, c = logits.shape
    itemsize = jnp.dtype(logits.dtype).itemsize
    targets_2d = targets.astype(jnp.int32).reshape(n, 1)

    tile_n = _pick_tile_n(n, c, itemsize)
    num_tiles = pl.cdiv(n, tile_n)

    kernel = functools.partial(_focal_loss_kernel, alpha=alpha, gamma=gamma,
                               n_valid=n, tile_n=tile_n)

    cost = pl.CostEstimate(
        flops=6 * n * c,
        transcendentals=n * (c + 2),
        bytes_accessed=n * c * itemsize + n * 4 + num_tiles * 8 * 128 * 4,
    )

    partials = pl.pallas_call(
        kernel,
        grid=(num_tiles,),
        out_shape=jax.ShapeDtypeStruct((num_tiles, 8, 128), jnp.float32),
        in_specs=[
            pl.BlockSpec((tile_n, c), lambda i: (i, 0)),
            pl.BlockSpec((tile_n, 1), lambda i: (i, 0)),
        ],
        out_specs=pl.BlockSpec((1, 8, 128), lambda i: (i, 0, 0)),
        compiler_params=pltpu.CompilerParams(
            dimension_semantics=("parallel",),
            # 4 MiB logits tile x double buffer + f32 cast / exp / onehot temporaries
            # ~= 20-24 MiB: above v5e's 16 MiB scoped default, below v7x's 64 MiB physical.
            vmem_limit_bytes=48 << 20,
        ),
        cost_estimate=cost,
    )(logits, targets_2d)

    # Finish the mean in plain JAX: sum of per-tile partials / true N.
    return jnp.sum(partials[:, 0, 0]) / jnp.float32(n)


def focal_loss_ref(logits, targets, alpha=1.0, gamma=2.0):
    # Pure-JAX reference mirroring torch.nn.functional.cross_entropy semantics.
    logits = logits.astype(jnp.float32)
    logp = jax.nn.log_softmax(logits, axis=-1)
    ce = -jnp.take_along_axis(logp, targets[:, None].astype(jnp.int32), axis=-1)[:, 0]
    pt = jnp.exp(-ce)
    q = jnp.maximum(1.0 - pt, 0.0)
    return jnp.mean(alpha * q ** gamma * ce)


if __name__ == "__main__":
    key = jax.random.PRNGKey(0)
    k1, k2, k3, k4 = jax.random.split(key, 4)

    # Small shape consistent with the module: batch of logits over C classes.
    N, C = 8, 128
    logits = jax.random.normal(k1, (N, C), dtype=jnp.float32)
    targets = jax.random.randint(k2, (N,), 0, C, dtype=jnp.int32)

    out = focal_loss(logits, targets, alpha=1.0, gamma=2.0)
    jax.block_until_ready(out)
    ref = focal_loss_ref(logits, targets, alpha=1.0, gamma=2.0)
    assert jnp.allclose(out, ref, rtol=1e-5, atol=1e-5), (out, ref)

    # Larger, ragged-N case to exercise the no-pad tiled grid + last-tile masking.
    N2, C2 = 1037, 256
    logits2 = jax.random.normal(k3, (N2, C2), dtype=jnp.float32)
    targets2 = jax.random.randint(k4, (N2,), 0, C2, dtype=jnp.int32)

    out2 = focal_loss(logits2, targets2, alpha=0.25, gamma=2.0)
    jax.block_until_ready(out2)
    ref2 = focal_loss_ref(logits2, targets2, alpha=0.25, gamma=2.0)
    assert jnp.allclose(out2, ref2, rtol=1e-5, atol=1e-5), (out2, ref2)

    print("KERNEL_OK")
</pallas_src>

<mosaic_0001>
module attributes {stable_mosaic.version = 11 : i64} {
  func.func @_focal_loss_kernel(%arg0: i32, %arg1: memref<8x128xf32, #tpu.memory_space<vmem>>, %arg2: memref<8x1xi32, #tpu.memory_space<vmem>>, %arg3: memref<1x8x128xf32, #tpu.memory_space<vmem>>) attributes {dimension_semantics = [#tpu.dimension_semantics<parallel>], iteration_bounds = array<i64: 1>, scalar_prefetch = 0 : i64, scratch_operands = 0 : i64, tpu.core_type = #tpu.core_type<tc>, window_params = [{transform_indices = @transform_0, window_bounds = array<i64: 8, 128>}, {transform_indices = @transform_1, window_bounds = array<i64: 8, 1>}, {transform_indices = @transform_2, window_bounds = array<i64: 1, 8, 128>}]} {
    %c0 = arith.constant 0 : index
    %c0_0 = arith.constant 0 : index
    %0 = vector.load %arg1[%c0, %c0_0] : memref<8x128xf32, #tpu.memory_space<vmem>>, vector<8x128xf32>
    %c0_1 = arith.constant 0 : index
    %c0_2 = arith.constant 0 : index
    %1 = vector.load %arg2[%c0_1, %c0_2] : memref<8x1xi32, #tpu.memory_space<vmem>>, vector<8x1xi32>
    %cst = arith.constant dense<0xFF800000> : vector<8xf32>
    %2 = vector.multi_reduction <maximumf>, %0, %cst [1] : vector<8x128xf32> to vector<8xf32>
    %3 = vector.shape_cast %2 : vector<8xf32> to vector<8x1xf32>
    %4 = vector.broadcast %3 : vector<8x1xf32> to vector<8x128xf32>
    %5 = arith.subf %0, %4 : vector<8x128xf32>
    %6 = math.exp %5 : vector<8x128xf32>
    %cst_3 = arith.constant dense<0.000000e+00> : vector<8xf32>
    %7 = vector.multi_reduction <add>, %6, %cst_3 [1] : vector<8x128xf32> to vector<8xf32>
    %8 = vector.shape_cast %7 : vector<8xf32> to vector<8x1xf32>
    %9 = math.log %8 : vector<8x1xf32>
    %10 = arith.addf %9, %3 : vector<8x1xf32>
    %11 = tpu.iota {dimensions = array<i32: 1>} : vector<8x128xi32>
    %12 = vector.broadcast %1 : vector<8x1xi32> to vector<8x128xi32>
    %13 = arith.cmpi eq, %11, %12 : vector<8x128xi32>
    %cst_4 = arith.constant 0.000000e+00 : f32
    %14 = vector.broadcast %cst_4 : f32 to vector<8x128xf32>
    %15 = arith.select %13, %0, %14 : vector<8x128xi1>, vector<8x128xf32>
    %cst_5 = arith.constant dense<0.000000e+00> : vector<8xf32>
    %16 = vector.multi_reduction <add>, %15, %cst_5 [1] : vector<8x128xf32> to vector<8xf32>
    %17 = vector.shape_cast %16 : vector<8xf32> to vector<8x1xf32>
    %18 = arith.subf %10, %17 : vector<8x1xf32>
    %cst_6 = arith.constant 0.000000e+00 : f32
    %19 = vector.broadcast %cst_6 : f32 to vector<8x1xf32>
    %20 = arith.subf %19, %18 : vector<8x1xf32>
    %21 = math.exp %20 : vector<8x1xf32>
    %cst_7 = arith.constant 1.000000e+00 : f32
    %22 = vector.broadcast %cst_7 : f32 to vector<8x1xf32>
    %23 = arith.subf %22, %21 : vector<8x1xf32>
    %cst_8 = arith.constant 0.000000e+00 : f32
    %24 = vector.broadcast %cst_8 : f32 to vector<8x1xf32>
    %25 = arith.maximumf %23, %24 : vector<8x1xf32>
    %cst_9 = arith.constant 1.000000e+00 : f32
    %26 = vector.broadcast %cst_9 : f32 to vector<8x1xf32>
    %27 = arith.mulf %26, %25 : vector<8x1xf32>
    %28 = arith.mulf %27, %25 : vector<8x1xf32>
    %cst_10 = arith.constant 1.000000e+00 : f32
    %29 = vector.broadcast %cst_10 : f32 to vector<8x1xf32>
    %30 = arith.mulf %29, %28 : vector<8x1xf32>
    %31 = arith.mulf %30, %18 : vector<8x1xf32>
    %32 = vector.shape_cast %31 : vector<8x1xf32> to vector<1x8x1xf32>
    %cst_11 = arith.constant dense<0.000000e+00> : vector<1xf32>
    %33 = vector.multi_reduction <add>, %32, %cst_11 [1, 2] : vector<1x8x1xf32> to vector<1xf32>
    %34 = vector.shape_cast %33 : vector<1xf32> to vector<1x1x1xf32>
    %35 = vector.extract %34[0, 0, 0] : f32 from vector<1x1x1xf32>
    %36 = vector.broadcast %35 : f32 to vector<1x8x128xf32>
    %c0_12 = arith.constant 0 : index
    %c0_13 = arith.constant 0 : index
    %c0_14 = arith.constant 0 : index
    %37 = vector.load %arg3[%c0_12, %c0_13, %c0_14] : memref<1x8x128xf32, #tpu.memory_space<vmem>>, vector<1x8x128xf32>
    tpu.vector_store %arg3[%c0_12, %c0_13, %c0_14], %36 {strides = array<i32>} : memref<1x8x128xf32, #tpu.memory_space<vmem>>, vector<1x8x128xf32>,
    return
  }
  func.func @transform_0(%arg0: i32) -> (i32, i32) {
    %c0_i32 = arith.constant 0 : i32
    %c0_i32_0 = arith.constant 0 : i32
    return %arg0, %c0_i32 : i32, i32
  }
  func.func @transform_1(%arg0: i32) -> (i32, i32) {
    %c0_i32 = arith.constant 0 : i32
    %c0_i32_0 = arith.constant 0 : i32
    return %arg0, %c0_i32 : i32, i32
  }
  func.func @transform_2(%arg0: i32) -> (i32, i32, i32) {
    %c0_i32 = arith.constant 0 : i32
    %c0_i32_0 = arith.constant 0 : i32
    %c0_i32_1 = arith.constant 0 : i32
    return %arg0, %c0_i32, %c0_i32_0 : i32, i32, i32
  }
}

</mosaic_0001>

<llo_original>
// kernel: tpu_custom_call.1
$region0: #{tpu_custom_call.1}
  #allocation0 [shape = 'u32[]', space=smem, size = 0x4, offset = 0x4, fixed_abs, tag = 'smem constant byte address 0x4 - core index']
  #allocation1 [shape = 'u32[144,128]{1,0:T(1,128)}', space=vmem, size = 0x12000, scoped, tag = 'internal scratch']
  %s0 = inlined_call_operand.vmem [shape: f32[8,128], index: 0, kind: input, shape index: {}]
  %s1 = inlined_call_operand.vmem [shape: s32[8,1], index: 1, kind: input, shape index: {}]
  %s2 = inlined_call_operand.hbm [shape: f32[1,8,128], index: 2, kind: output, shape index: {}]
  %s3 = sld [smem:[#allocation0]]
  $region18: #{tpu_custom_call.1} parent=0
    _
  %s5 = ssub.s32 1, %s3
  %s6 = scalar_select 0, %s5, %s3
  $region1: #{tpu_custom_call.1} parent=0
    #allocation2 [shape = 'u8[4096]{0}', space=vmem, size = 0x1000, scoped, tag = 'output window, operand 0, single buffered']
    #allocation3 [shape = 's32[1]{0}', space=sflag, size = 0x4, scoped, tag = 'scoped memory for tpu_custom_call.1']
    %7 = vsyncpa [#allocation3], 0
    // Predicated region
    $region2: #{tpu_custom_call.1} parent=1 // pred_check
      _
    $region3: #{tpu_custom_call.1} parent=1 // pred_check_branch
      %9 = sbr.rel (0) target = $region5
    $region4: #{tpu_custom_call.1} parent=1 // pred_region
      _
    $region5: #{tpu_custom_call.1} parent=1 // pred_fallthru
      _
    // Predicated region
    $region6: #{tpu_custom_call.1} parent=1 // pred_check
      _
    $region7: #{tpu_custom_call.1} parent=1 // pred_check_branch
      %11 = sbr.rel (0) target = $region9
    $region8: #{tpu_custom_call.1} parent=1 // pred_region
      _
    $region9: #{tpu_custom_call.1} parent=1 // pred_fallthru
      _
    %v12 = vld [vmem:[%s0] sm:$0xff]
    %v13 = vld [vmem:[%s1] sm:$0xff]
    %14 = vmax.xlane.f32.xlu0 %v12
    %v15 = vpop.xlane.xlu0 %14
    %v16 = vsub.f32 %v12, %v15
    %v17 = vmul.f32 %v16, 1.442695
    %v18 = vpow.pop %v17
    %19 = vadd.xlane.f32.xlu0 %v18
    %v20 = vpop.xlane.xlu0 %19
    %v21 = vlog2.pop %v20
    %v22 = vmul.f32 %v21, 0.6931472
    %v23 = vadd.f32 %v22, %v15
    %v24 = vlaneseq
    %v25 = vand.u32 %v24, 127
    %26 = vset.pattern.permute.xlu0 0
    %27 = vperm.xlu0 %26, %v13
    %v28 = vpop.permute.xlu0 %27
    %vm29 = vcmp.eq.s32.totalorder %v25, %v28
    %v30 = vsel %vm29, %v12, 0.0
    %31 = vadd.xlane.f32.xlu0 %v30
    %v32 = vpop.xlane.xlu0 %31
    %v33 = vsub.f32 %v23, %v32
    %v34 = vsub.f32 0.0, %v33
    %v35 = vmul.f32 %v34, 1.442695
    %v36 = vpow.pop %v35
    %v37 = vsub.f32 1.0, %v36
    %v38 = vmax.f32 %v37, 0.0
    %v39 = vmul.f32 %v38, %v38
    %v40 = vmul.f32 %v39, %v33
    %vm41 = vcmask 7168
    %v42 = vsel %vm41, %v40, 0.0
    %43 = vadd.xlane.f32.xlu0 %v42
    %v44 = vpop.xlane.xlu0 %43
    %v45 = vrot.slane %v44, 4
    %v46 = vadd.f32 %v44, %v45
    %v47 = vrot.slane %v46, 2
    %v48 = vadd.f32 %v46, %v47
    %v49 = vrot.slane %v48, 1
    %v50 = vadd.f32 %v48, %v49
    %s51 = vtos %v50
    %v52 = vstv %s51
    %53 = vst [vmem:[#allocation2] sm:$0xff] %v52
    // Predicated region
    $region10: #{tpu_custom_call.1} parent=1 // pred_check
      _
    $region11: #{tpu_custom_call.1} parent=1 // pred_check_branch
      %55 = sbr.rel (0) target = $region13
    $region12: #{tpu_custom_call.1} parent=1 // pred_region
      %s57 = ssub.s32 128, 128
      %58 = vsyncadd [#allocation3], %s57
      %s60 = sshll.u32 [#allocation2], 4
      %s61 = int_to_ptr.vmem [resolvable:$true] %s60
      %63 = dma.vmem_to_hbm [thread:$0]  %s61, 128, %s2, [#allocation3]
    $region13: #{tpu_custom_call.1} parent=1 // pred_fallthru
      _
    // Predicated region
    $region14: #{tpu_custom_call.1} parent=1 // pred_check
      _
    $region15: #{tpu_custom_call.1} parent=1 // pred_check_branch
      %65 = sbr.rel (0) target = $region17
    $region16: #{tpu_custom_call.1} parent=1 // pred_region
      %66 = dma.done [#allocation3], 128
    $region17: #{tpu_custom_call.1} parent=1 // pred_fallthru
      _
    %67 = vsyncpa [#allocation3], 1

</llo_original>
